<compile_context>
chip_gen: v6e
topology: v6e:2x2x1
jax: 0.10.0
libtpu: 0.0.40
codegen_flags: <defaults>
</compile_context>

<pallas_src>
import jax
import jax.numpy as jnp
from jax.experimental import pallas as pl
from jax.experimental.pallas import tpu as pltpu


def _noise_injection_kernel(img_ref, noise_ref, w_ref, out_ref):
    # img_ref / noise_ref / out_ref: (BR, L_blk) VMEM tiles.
    # w_ref: (BR, 1) per-row scale (channel weight, expanded over batch).
    # (BR,1) * (BR,L_blk) is a cheap lane-broadcast on the VPU.
    img = img_ref[...]
    nz = noise_ref[...]
    w = w_ref[...]
    out_ref[...] = (img + w * nz).astype(out_ref.dtype)


def noise_injection(image, noise, weight, *,
                    target_block_bytes=4 << 20,
                    vmem_budget_bytes=48 << 20):
    """image, noise: (N, C, H, W); weight: (1, C, 1, 1) (or (C,)). Returns (N, C, H, W)."""
    N, C, H, W = image.shape
    M = N * C          # rows  -> sublane-ish axis, tiled by grid axis 0
    L = H * W          # lanes -> tiled by grid axis 1 (kept whole when it fits)
    dtype = image.dtype
    itemsize = jnp.dtype(dtype).itemsize
    # dtype-aware sublane multiple: f32 -> 8, bf16 -> 16, int8/fp8 -> 32.
    sub = max(8, 32 // itemsize)

    img2 = image.reshape(M, L)
    nz2 = noise.reshape(M, L)
    # Row r of the (N*C, L) view belongs to channel r % C: expand the per-channel
    # weight to one scalar per row.  Tiny (M elements) vs 3*M*L of main traffic,
    # and kept in the parameter dtype so the multiply happens in promoted precision.
    w_dtype = weight.dtype
    w_rows = jnp.broadcast_to(jnp.reshape(weight, (1, C)), (N, C)).reshape(M, 1).astype(w_dtype)

    # ---- Block sizing (double-buffer aware) --------------------------------
    # 2 buffers x (image + noise + out) blocks must stay well inside the scoped
    # VMEM budget we request below; keep ~25% headroom for the weight column and
    # compiler scratch.
    max_block_bytes = min(target_block_bytes, (vmem_budget_bytes * 3 // 4) // 6)
    max_block_bytes = max(max_block_bytes, sub * 128 * itemsize)   # never below one tile

    row_bytes = L * itemsize
    if sub * row_bytes <= max_block_bytes:
        L_blk = L                                    # full, lane-dense rows
    else:
        # Fat rows (large H*W): tile the lane axis in multiples of 128 so that a
        # minimal `sub`-row block still fits the budget on every TPU generation.
        L_blk = max(128, (max_block_bytes // (sub * itemsize)) // 128 * 128)
        L_blk = min(L_blk, L)

    br = max(1, max_block_bytes // (L_blk * itemsize))
    if br >= M:
        br = M                                       # full-extent dim is always legal
    else:
        br = max(sub, (br // sub) * sub)             # dtype-aware sublane rounding

    rows_grid = pl.cdiv(M, br)
    lanes_grid = pl.cdiv(L, L_blk)

    # Megacore: guarantee >= 2 grid steps so both v7x TensorCores get work.
    # Prefer splitting rows (keeps blocks lane-dense); fall back to halving lanes.
    if rows_grid * lanes_grid == 1:
        if M >= 2 * sub:
            br = sub * pl.cdiv(pl.cdiv(M, 2), sub)
            rows_grid = pl.cdiv(M, br)
        elif L >= 256 and L % 256 == 0:
            L_blk = L // 2
            lanes_grid = 2

    grid = (rows_grid, lanes_grid)

    cost = pl.CostEstimate(
        flops=2 * M * L,
        transcendentals=0,
        bytes_accessed=3 * M * L * itemsize + M * jnp.dtype(w_dtype).itemsize,
    )

    out2 = pl.pallas_call(
        _noise_injection_kernel,
        out_shape=jax.ShapeDtypeStruct((M, L), dtype),
        grid_spec=pltpu.PrefetchScalarGridSpec(
            num_scalar_prefetch=0,
            grid=grid,
            in_specs=[
                pl.BlockSpec((br, L_blk), lambda i, j: (i, j)),   # image tile
                pl.BlockSpec((br, L_blk), lambda i, j: (i, j)),   # noise tile
                pl.BlockSpec((br, 1), lambda i, j: (i, 0)),       # per-row weight column
            ],
            out_specs=pl.BlockSpec((br, L_blk), lambda i, j: (i, j)),
        ),
        compiler_params=pltpu.CompilerParams(
            dimension_semantics=("parallel", "parallel"),
            vmem_limit_bytes=vmem_budget_bytes,
        ),
        cost_estimate=cost,
    )(img2, nz2, w_rows)

    return out2.reshape(N, C, H, W)


def noise_injection_reference(image, noise, weight):
    """Pure-JAX reference matching the PyTorch forward."""
    return image + weight * noise


if __name__ == "__main__":
    key = jax.random.PRNGKey(0)
    N, C, H, W = 2, 4, 16, 16
    k_img, k_noise = jax.random.split(key)

    image = jax.random.normal(k_img, (N, C, H, W), dtype=jnp.float32)
    noise = jax.random.normal(k_noise, (N, C, H, W), dtype=jnp.float32)
    # nn.Parameter(torch.ones(1, channel, 1, 1) * 0.01)
    weight = jnp.full((1, C, 1, 1), 0.01, dtype=jnp.float32)

    out = noise_injection(image, noise, weight)
    out = jax.block_until_ready(out)

    ref = noise_injection_reference(image, noise, weight)
    assert out.shape == (N, C, H, W)
    assert jnp.allclose(out, ref, atol=1e-6, rtol=1e-6)

    print("KERNEL_OK")
</pallas_src>

<mosaic_0001>
module attributes {stable_mosaic.version = 11 : i64} {
  func.func @_noise_injection_kernel(%arg0: i32, %arg1: i32, %arg2: memref<8x128xf32, #tpu.memory_space<vmem>>, %arg3: memref<8x128xf32, #tpu.memory_space<vmem>>, %arg4: memref<8x1xf32, #tpu.memory_space<vmem>>, %arg5: memref<8x128xf32, #tpu.memory_space<vmem>>) attributes {dimension_semantics = [#tpu.dimension_semantics<parallel>, #tpu.dimension_semantics<parallel>], iteration_bounds = array<i64: 1, 2>, scalar_prefetch = 0 : i64, scratch_operands = 0 : i64, tpu.core_type = #tpu.core_type<tc>, window_params = [{transform_indices = @transform_0, window_bounds = array<i64: 8, 128>}, {transform_indices = @transform_1, window_bounds = array<i64: 8, 128>}, {transform_indices = @transform_2, window_bounds = array<i64: 8, 1>}, {transform_indices = @transform_3, window_bounds = array<i64: 8, 128>}]} {
    %c0 = arith.constant 0 : index
    %c0_0 = arith.constant 0 : index
    %0 = vector.load %arg2[%c0, %c0_0] : memref<8x128xf32, #tpu.memory_space<vmem>>, vector<8x128xf32>
    %c0_1 = arith.constant 0 : index
    %c0_2 = arith.constant 0 : index
    %1 = vector.load %arg3[%c0_1, %c0_2] : memref<8x128xf32, #tpu.memory_space<vmem>>, vector<8x128xf32>
    %c0_3 = arith.constant 0 : index
    %c0_4 = arith.constant 0 : index
    %2 = vector.load %arg4[%c0_3, %c0_4] : memref<8x1xf32, #tpu.memory_space<vmem>>, vector<8x1xf32>
    %3 = vector.broadcast %2 : vector<8x1xf32> to vector<8x128xf32>
    %4 = arith.mulf %3, %1 : vector<8x128xf32>
    %5 = arith.addf %0, %4 : vector<8x128xf32>
    %c0_5 = arith.constant 0 : index
    %c0_6 = arith.constant 0 : index
    %6 = vector.load %arg5[%c0_5, %c0_6] : memref<8x128xf32, #tpu.memory_space<vmem>>, vector<8x128xf32>
    tpu.vector_store %arg5[%c0_5, %c0_6], %5 {strides = array<i32>} : memref<8x128xf32, #tpu.memory_space<vmem>>, vector<8x128xf32>,
    return
  }
  func.func @transform_0(%arg0: i32, %arg1: i32) -> (i32, i32) {
    %c0_i32 = arith.constant 0 : i32
    return %arg0, %arg1 : i32, i32
  }
  func.func @transform_1(%arg0: i32, %arg1: i32) -> (i32, i32) {
    %c0_i32 = arith.constant 0 : i32
    return %arg0, %arg1 : i32, i32
  }
  func.func @transform_2(%arg0: i32, %arg1: i32) -> (i32, i32) {
    %c0_i32 = arith.constant 0 : i32
    %c0_i32_0 = arith.constant 0 : i32
    return %arg0, %c0_i32 : i32, i32
  }
  func.func @transform_3(%arg0: i32, %arg1: i32) -> (i32, i32) {
    %c0_i32 = arith.constant 0 : i32
    return %arg0, %arg1 : i32, i32
  }
}

</mosaic_0001>

<llo_original>
// kernel: tpu_custom_call.1
$region0: #{tpu_custom_call.1}
  #allocation0 [shape = 'u32[]', space=smem, size = 0x4, offset = 0x4, fixed_abs, tag = 'smem constant byte address 0x4 - core index']
  #allocation1 [shape = 'u32[144,128]{1,0:T(1,128)}', space=vmem, size = 0x12000, scoped, tag = 'internal scratch']
  %s0 = inlined_call_operand.hbm [shape: f32[8,256], index: 0, kind: input, shape index: {}]
  %s1 = inlined_call_operand.hbm [shape: f32[8,256], index: 1, kind: input, shape index: {}]
  %s2 = inlined_call_operand.vmem [shape: f32[8,1], index: 2, kind: input, shape index: {}]
  %s3 = inlined_call_operand.hbm [shape: f32[8,256], index: 3, kind: output, shape index: {}]
  %s4 = sld [smem:[#allocation0]]
  $region53: #{tpu_custom_call.1} parent=0
    _
  %s6 = ssub.s32 1, %s4
  %s7 = scalar_select 0, %s6, %s4
  $region1: #{tpu_custom_call.1} parent=0
    #allocation2 [shape = 'u8[8192]{0}', space=vmem, size = 0x2000, scoped, tag = 'input window, operand 0']
    #allocation3 [shape = 's32[2]{0}', space=sflag, size = 0x8, scoped, tag = 'scoped memory for tpu_custom_call.1']
    #allocation4 [shape = 's32[2]{0}', space=sflag, size = 0x8, scoped, tag = 'scoped memory for tpu_custom_call.1']
    #allocation5 [shape = 'u8[8192]{0}', space=vmem, size = 0x2000, scoped, tag = 'input window, operand 1']
    #allocation6 [shape = 's32[2]{0}', space=sflag, size = 0x8, scoped, tag = 'scoped memory for tpu_custom_call.1']
    #allocation7 [shape = 'u8[8192]{0}', space=vmem, size = 0x2000, scoped, tag = 'output window, operand 0']
    %8 = vsyncpa [#allocation3], 0
    %s9 = scalar_lea.sflag [#allocation3], 1
    %10 = vsyncpa %s9, 0
    %11 = vsyncpa [#allocation6], 0
    %s12 = scalar_lea.sflag [#allocation6], 1
    %13 = vsyncpa %s12, 0
    %14 = vsyncpa [#allocation4], 0
    %s15 = scalar_lea.sflag [#allocation4], 1
    %16 = vsyncpa %s15, 0
    loop: start=0, step=1, limit=4
    $region2: #{tpu_custom_call.1} parent=1 // loop_pre_header
      _
    $region3: #{tpu_custom_call.1} parent=1 // loop_header
      %s18 = sphi 0, %s22
      %p19 = scmp.ge.s32.totalorder %s18, 4
      %s25 = sphi 0, %s37
      %s26 = sphi 0, %s33
      %s27 = sphi 0, %s25
      %s28 = sphi 0, %s26
      %s29 = sphi 0, %s27
      %s30 = sphi 0, %s28
      %s42 = sphi 0, %s44
      %s45 = sphi 0, %s42
      %s46 = sphi 0, %s45
      %s62 = sphi 0, %s46
      %s70 = sphi 0, %s72
      %s73 = sphi 0, %s70
      %s74 = sphi 0, %s73
      %s90 = sphi 0, %s74
      %s96 = sphi 0, %s98
      %s99 = sphi 0, %s96
      %s100 = sphi 0, %s99
      %s116 = sphi 0, %s100
      %s124 = sphi 0, %s126
      %s127 = sphi 0, %s124
      %s128 = sphi 0, %s127
      %s144 = sphi 0, %s128
    $region4: #{tpu_custom_call.1} parent=1 // loop_header_branch
      %21 = sbr.rel (%p19) target = $region8
    $region5: #{tpu_custom_call.1} parent=1 // loop_body
      %s23 = ssub.s32 %s18, 1
      %s24 = ssub.s32 %s18, 2
      %s31 = sadd.s32 1, %s26
      %p32 = scmp.ge.s32.totalorder %s31, 2
      %s33 = scalar_select %p32, 0, %s31
      %s34 = sadd.s32 1, %s25
      %s35 = scalar_select %p32, %s34, %s25
      %p36 = scmp.ge.s32.totalorder %s35, 1
      %s37 = scalar_select %p36, 0, %s35
      %s38 = ssub.s32 %s25, %s37
      %s39 = ssub.s32 %s26, %s33
      %s40 = sor.u32 %s38, %s39
      %p41 = scmp.eq.s32.totalorder %s40, 0
      %s43 = sadd.s32 %s42, 1
      %s44 = scalar_select %p41, %s42, %s43
      %p47 = pneg %p41
      %p48 = scmp.eq.s32.totalorder %s18, 1
      %p49 = por %p47, %p48
      %p50 = scmp.ne.s32.totalorder %s42, %s45
      %p51 = scmp.eq.s32.totalorder %s18, 0
      %p52 = por %p50, %p51
      %p53 = scmp.ne.s32.totalorder %s42, %s45
      %p54 = scmp.eq.s32.totalorder %s23, 1
      %p55 = por %p53, %p54
      %p56 = scmp.ne.s32.totalorder %s45, %s46
      %p57 = scmp.eq.s32.totalorder %s23, 0
      %p58 = por %p56, %p57
      %p59 = scmp.ne.s32.totalorder %s45, %s46
      %p60 = scmp.eq.s32.totalorder %s24, 1
      %p61 = por %p59, %p60
      %p63 = scmp.ne.s32.totalorder %s46, %s62
      %p64 = scmp.eq.s32.totalorder %s24, 0
      %p65 = por %p63, %p64
      %s66 = ssub.s32 %s25, %s37
      %s67 = ssub.s32 %s26, %s33
      %s68 = sor.u32 %s66, %s67
      %p69 = scmp.eq.s32.totalorder %s68, 0
      %s71 = sadd.s32 %s70, 1
      %s72 = scalar_select %p69, %s70, %s71
      %p75 = pneg %p69
      %p76 = scmp.eq.s32.totalorder %s18, 1
      %p77 = por %p75, %p76
      %p78 = scmp.ne.s32.totalorder %s70, %s73
      %p79 = scmp.eq.s32.totalorder %s18, 0
      %p80 = por %p78, %p79
      %p81 = scmp.ne.s32.totalorder %s70, %s73
      %p82 = scmp.eq.s32.totalorder %s23, 1
      %p83 = por %p81, %p82
      %p84 = scmp.ne.s32.totalorder %s73, %s74
      %p85 = scmp.eq.s32.totalorder %s23, 0
      %p86 = por %p84, %p85
      %p87 = scmp.ne.s32.totalorder %s73, %s74
      %p88 = scmp.eq.s32.totalorder %s24, 1
      %p89 = por %p87, %p88
      %p91 = scmp.ne.s32.totalorder %s74, %s90
      %p92 = scmp.eq.s32.totalorder %s24, 0
      %p93 = por %p91, %p92
      %s94 = ssub.s32 %s25, %s37
      %p95 = scmp.eq.s32.totalorder %s94, 0
      %s97 = sadd.s32 %s96, 1
      %s98 = scalar_select %p95, %s96, %s97
      %p101 = pneg %p95
      %p102 = scmp.eq.s32.totalorder %s18, 1
      %p103 = por %p101, %p102
      %p104 = scmp.ne.s32.totalorder %s96, %s99
      %p105 = scmp.eq.s32.totalorder %s18, 0
      %p106 = por %p104, %p105
      %p107 = scmp.ne.s32.totalorder %s96, %s99
      %p108 = scmp.eq.s32.totalorder %s23, 1
      %p109 = por %p107, %p108
      %p110 = scmp.ne.s32.totalorder %s99, %s100
      %p111 = scmp.eq.s32.totalorder %s23, 0
      %p112 = por %p110, %p111
      %p113 = scmp.ne.s32.totalorder %s99, %s100
      %p114 = scmp.eq.s32.totalorder %s24, 1
      %p115 = por %p113, %p114
      %p117 = scmp.ne.s32.totalorder %s100, %s116
      %p118 = scmp.eq.s32.totalorder %s24, 0
      %p119 = por %p117, %p118
      %s120 = ssub.s32 %s25, %s37
      %s121 = ssub.s32 %s26, %s33
      %s122 = sor.u32 %s120, %s121
      %p123 = scmp.eq.s32.totalorder %s122, 0
      %s125 = sadd.s32 %s124, 1
      %s126 = scalar_select %p123, %s124, %s125
      %p129 = pneg %p123
      %p130 = scmp.eq.s32.totalorder %s18, 1
      %p131 = por %p129, %p130
      %p132 = scmp.ne.s32.totalorder %s124, %s127
      %p133 = scmp.eq.s32.totalorder %s18, 0
      %p134 = por %p132, %p133
      %p135 = scmp.ne.s32.totalorder %s124, %s127
      %p136 = scmp.eq.s32.totalorder %s23, 1
      %p137 = por %p135, %p136
      %p138 = scmp.ne.s32.totalorder %s127, %s128
      %p139 = scmp.eq.s32.totalorder %s23, 0
      %p140 = por %p138, %p139
      %p141 = scmp.ne.s32.totalorder %s127, %s128
      %p142 = scmp.eq.s32.totalorder %s24, 1
      %p143 = por %p141, %p142
      %p145 = scmp.ne.s32.totalorder %s128, %s144
      %p146 = scmp.eq.s32.totalorder %s24, 0
      %p147 = por %p145, %p146
      %p148 = scmp.le.s32.totalorder 1, %s18
      %p149 = scmp.lt.s32.totalorder %s18, 3
      %p150 = pnand %p148, %p149
      %p151 = pneg %p150
      // Predicated region
      $region9: #{tpu_custom_call.1} parent=5 // pred_check
        _
      $region10: #{tpu_custom_call.1} parent=5 // pred_check_branch
        %153 = sbr.rel (%p150) target = $region12
      $region11: #{tpu_custom_call.1} parent=5 // pred_region
        %s154 = ssub.s32 %s18, 1
        // Predicated region
        $region13: #{tpu_custom_call.1} parent=11 // pred_check
          %p155 = pneg %p112
        $region14: #{tpu_custom_call.1} parent=11 // pred_check_branch
          %157 = sbr.rel (%p155) target = $region16
        $region15: #{tpu_custom_call.1} parent=11 // pred_region
          %p158 = scmp.lt.s32.totalorder %s27, 0
          %s159 = scalar_select %p158, %s27, 0
          %s160 = smul.addr %s159, 8
          %s161 = scalar_lea.vmem %s2, %s160
        $region16: #{tpu_custom_call.1} parent=11 // pred_fallthru
          _
      $region12: #{tpu_custom_call.1} parent=5 // pred_fallthru
        _
      %p162 = scmp.lt.s32.totalorder %s18, 2
      // Predicated region
      $region17: #{tpu_custom_call.1} parent=5 // pred_check
        %p163 = pneg %p162
      $region18: #{tpu_custom_call.1} parent=5 // pred_check_branch
        %165 = sbr.rel (%p163) target = $region20
      $region19: #{tpu_custom_call.1} parent=5 // pred_region
        // Predicated region
        $region21: #{tpu_custom_call.1} parent=19 // pred_check
          %p166 = pneg %p52
        $region22: #{tpu_custom_call.1} parent=19 // pred_check_branch
          %168 = sbr.rel (%p166) target = $region24
        $region23: #{tpu_custom_call.1} parent=19 // pred_region
          %s169 = sand.u32 %s42, 1
          %s170 = scalar_lea.sflag [#allocation3], %s169
          %s171 = sand.u32 %s42, 1
          %s172 = smul.addr %s171, 8
          %s173 = scalar_lea.vmem [#allocation2], %s172
          %s175 = ssub.s32 128, 128
          %176 = vsyncadd %s170, %s175
          %s177 = smul.addr %s25, 2
          %s178 = sadd.s32 %s26, %s177
          %s179 = smul.addr %s178, 128
          %s180 = scalar_lea.hbm %s0, %s179
          %s182 = sshll.u32 %s173, 4
          %s183 = int_to_ptr.vmem [resolvable:$true] %s182
          %185 = dma.hbm_to_vmem [thread:$0]  %s180, 128, %s183, %s170
        $region24: #{tpu_custom_call.1} parent=19 // pred_fallthru
          _
        // Predicated region
        $region25: #{tpu_custom_call.1} parent=19 // pred_check
          %p186 = pneg %p80
        $region26: #{tpu_custom_call.1} parent=19 // pred_check_branch
          %188 = sbr.rel (%p186) target = $region28
        $region27: #{tpu_custom_call.1} parent=19 // pred_region
          %s189 = sand.u32 %s70, 1
          %s190 = scalar_lea.sflag [#allocation6], %s189
          %s191 = sand.u32 %s70, 1
          %s192 = smul.addr %s191, 8
          %s193 = scalar_lea.vmem [#allocation5], %s192
          %s195 = ssub.s32 128, 128
          %196 = vsyncadd %s190, %s195
          %s197 = smul.addr %s25, 2
          %s198 = sadd.s32 %s26, %s197
          %s199 = smul.addr %s198, 128
          %s200 = scalar_lea.hbm %s1, %s199
          %s202 = sshll.u32 %s193, 4
          %s203 = int_to_ptr.vmem [resolvable:$true] %s202
          %205 = dma.hbm_to_vmem [thread:$0]  %s200, 128, %s203, %s190
        $region28: #{tpu_custom_call.1} parent=19 // pred_fallthru
          _
      $region20: #{tpu_custom_call.1} parent=5 // pred_fallthru
        _
      %p206 = scmp.le.s32.totalorder 1, %s18
      %p207 = scmp.lt.s32.totalorder %s18, 3
      %p208 = pnand %p206, %p207
      %p209 = pneg %p208
      // Predicated region
      $region29: #{tpu_custom_call.1} parent=5 // pred_check
        _
      $region30: #{tpu_custom_call.1} parent=5 // pred_check_branch
        %211 = sbr.rel (%p208) target = $region32
      $region31: #{tpu_custom_call.1} parent=5 // pred_region
        %s212 = ssub.s32 %s18, 1
        %s213 = sand.u32 %s45, 1
        %s214 = scalar_lea.sflag [#allocation3], %s213
        %s215 = sand.u32 %s45, 1
        %s216 = smul.addr %s215, 8
        %s217 = scalar_lea.vmem [#allocation2], %s216
        // Predicated region
        $region33: #{tpu_custom_call.1} parent=31 // pred_check
          %p218 = pneg %p58
        $region34: #{tpu_custom_call.1} parent=31 // pred_check_branch
          %220 = sbr.rel (%p218) target = $region36
        $region35: #{tpu_custom_call.1} parent=31 // pred_region
          %221 = dma.done %s214, 128
        $region36: #{tpu_custom_call.1} parent=31 // pred_fallthru
          _
        %s222 = sand.u32 %s73, 1
        %s223 = scalar_lea.sflag [#allocation6], %s222
        %s224 = sand.u32 %s73, 1
        %s225 = smul.addr %s224, 8
        %s226 = scalar_lea.vmem [#allocation5], %s225
        // Predicated region
        $region37: #{tpu_custom_call.1} parent=31 // pred_check
          %p227 = pneg %p86
        $region38: #{tpu_custom_call.1} parent=31 // pred_check_branch
          %229 = sbr.rel (%p227) target = $region40
        $region39: #{tpu_custom_call.1} parent=31 // pred_region
          %230 = dma.done %s223, 128
        $region40: #{tpu_custom_call.1} parent=31 // pred_fallthru
          _
        %s231 = sand.u32 %s45, 1
        %s232 = scalar_lea.sflag [#allocation3], %s231
        %s233 = sand.u32 %s45, 1
        %s234 = smul.addr %s233, 8
        %s235 = scalar_lea.vmem [#allocation2], %s234
        %p236 = pneg %p58
        %p237 = pneg %p55
        %s238 = sand.u32 %s73, 1
        %s239 = scalar_lea.sflag [#allocation6], %s238
        %s240 = sand.u32 %s73, 1
        %s241 = smul.addr %s240, 8
        %s242 = scalar_lea.vmem [#allocation5], %s241
        %p243 = pneg %p86
        %p244 = pneg %p83
        %p245 = scmp.lt.s32.totalorder %s27, 0
        %s246 = scalar_select %p245, %s27, 0
        %s247 = smul.addr %s246, 8
        %s248 = scalar_lea.vmem %s2, %s247
        %p249 = pneg %p112
        %p250 = pneg %p109
        %p251 = pneg %p140
        %p252 = pneg %p137
        %s253 = sand.u32 %s127, 1
        %s254 = scalar_lea.sflag [#allocation4], %s253
        %s255 = sand.u32 %s127, 1
        %s256 = smul.addr %s255, 8
        %s257 = scalar_lea.vmem [#allocation7], %s256
        %p258 = scmp.lt.s32.totalorder %s27, 0
        %s259 = scalar_select %p258, %s27, 0
        %s260 = smul.addr %s259, 8
        %s261 = scalar_lea.vmem %s2, %s260
        %v262 = vld [vmem:[%s217] sm:$0xff]
        %v263 = vld [vmem:[%s226] sm:$0xff]
        %v264 = vld [vmem:[%s261] sm:$0xff]
        %266 = vset.pattern.permute.xlu0 0
        %267 = vperm.xlu0 %266, %v264
        %v268 = vpop.permute.xlu0 %267
        %v270 = vmul.f32 %v268, %v263
        %v271 = vadd.f32 %v262, %v270
        %272 = vst [vmem:[%s257] sm:$0xff] %v271
        %s273 = sand.u32 %s127, 1
        %s274 = scalar_lea.sflag [#allocation4], %s273
        %s275 = sand.u32 %s127, 1
        %s276 = smul.addr %s275, 8
        %s277 = scalar_lea.vmem [#allocation7], %s276
        // Predicated region
        $region41: #{tpu_custom_call.1} parent=31 // pred_check
          %p278 = pneg %p137
        $region42: #{tpu_custom_call.1} parent=31 // pred_check_branch
          %280 = sbr.rel (%p278) target = $region44
        $region43: #{tpu_custom_call.1} parent=31 // pred_region
          %s282 = ssub.s32 128, 128
          %283 = vsyncadd %s274, %s282
          %s284 = smul.addr %s27, 2
          %s285 = sadd.s32 %s28, %s284
          %s286 = smul.addr %s285, 128
          %s287 = scalar_lea.hbm %s3, %s286
          %s289 = sshll.u32 %s277, 4
          %s290 = int_to_ptr.vmem [resolvable:$true] %s289
          %292 = dma.vmem_to_hbm [thread:$0]  %s290, 128, %s287, %s274
        $region44: #{tpu_custom_call.1} parent=31 // pred_fallthru
          _
      $region32: #{tpu_custom_call.1} parent=5 // pred_fallthru
        _
      %p293 = scmp.le.s32.totalorder 2, %s18
      // Predicated region
      $region45: #{tpu_custom_call.1} parent=5 // pred_check
        %p294 = pneg %p293
      $region46: #{tpu_custom_call.1} parent=5 // pred_check_branch
        %296 = sbr.rel (%p294) target = $region48
      $region47: #{tpu_custom_call.1} parent=5 // pred_region
        %s297 = ssub.s32 %s18, 2
        // Predicated region
        $region49: #{tpu_custom_call.1} parent=47 // pred_check
          %p298 = pneg %p143
        $region50: #{tpu_custom_call.1} parent=47 // pred_check_branch
          %300 = sbr.rel (%p298) target = $region52
        $region51: #{tpu_custom_call.1} parent=47 // pred_region
          %s301 = sand.u32 %s128, 1
          %s302 = scalar_lea.sflag [#allocation4], %s301
          %s303 = sand.u32 %s128, 1
          %s304 = smul.addr %s303, 8
          %s305 = scalar_lea.vmem [#allocation7], %s304
          %306 = dma.done %s302, 128
        $region52: #{tpu_custom_call.1} parent=47 // pred_fallthru
          _
      $region48: #{tpu_custom_call.1} parent=5 // pred_fallthru
        _
    $region6: #{tpu_custom_call.1} parent=1 // loop_footer
      %s22 = sadd.s32 1, %s18
    $region7: #{tpu_custom_call.1} parent=1 // loop_footer_branch
      %17 = sbr.rel target = $region3
    $region8: #{tpu_custom_call.1} parent=1 // loop_exit
      _
    %307 = vsyncpa [#allocation3], 1
    %s308 = scalar_lea.sflag [#allocation3], 1
    %309 = vsyncpa %s308, 1
    %310 = vsyncpa [#allocation6], 1
    %s311 = scalar_lea.sflag [#allocation6], 1
    %312 = vsyncpa %s311, 1
    %313 = vsyncpa [#allocation4], 1
    %s314 = scalar_lea.sflag [#allocation4], 1
    %315 = vsyncpa %s314, 1

</llo_original>
